<compile_context>
chip_gen: v6e
topology: v6e:2x2x1
jax: 0.10.0
libtpu: 0.0.40
codegen_flags: <defaults>
</compile_context>

<pallas_src>
import functools

import jax
import jax.numpy as jnp
from jax.experimental import pallas as pl
from jax.experimental.pallas import tpu as pltpu


def _l2_normalize_rows(x):
    # F.normalize(p=2, dim=1): x / max(||x||, 1e-12)  ==  x * rsqrt(max(ss, 1e-24))
    ss = jnp.sum(x * x, axis=1, keepdims=True)
    return x * jax.lax.rsqrt(jnp.maximum(ss, 1e-24))


def _infonce_kernel(q_ref, k_ref, out_ref, pos_ref, l_ref, m_ref, *,
                    inv_temp, half_n, use_online_max):
    i = pl.program_id(0)          # row block
    j = pl.program_id(1)          # column block (reduction axis)
    tq = q_ref.shape[0]
    tk = k_ref.shape[0]

    @pl.when(j == 0)
    def _init():
        pos_ref[...] = jnp.zeros((tq, 1), jnp.float32)
        l_ref[...] = jnp.zeros((tq, 1), jnp.float32)
        if use_online_max:
            m_ref[...] = jnp.full((tq, 1), -1e30, jnp.float32)

    # Raw cosine similarities for this tile: pre-normalized bf16 operands,
    # f32 MXU accumulate, contracting the last dims (no transpose materialized).
    sim = jax.lax.dot_general(
        q_ref[...], k_ref[...],
        dimension_numbers=(((1,), (1,)), ((), ())),
        preferred_element_type=jnp.float32)                     # (tq, tk)

    row0 = i * tq                                               # global row offset
    col0 = j * tk                                               # global col offset
    col_ids = jax.lax.broadcasted_iota(jnp.int32, (tq, tk), 1)
    row_iota = jax.lax.broadcasted_iota(jnp.int32, (tq, 1), 0)

    # ---- positive (label) logit: row r's positive is its partner row r +/- B.
    # Extracted from the very same MXU tile; only runs when the partner columns
    # intersect this column block.
    delta = jnp.where(row0 < half_n, jnp.int32(half_n), jnp.int32(-half_n))
    pos_off = row0 + delta - col0
    pos_in_tile = jnp.logical_and(pos_off < tk, pos_off + tq > 0)

    @pl.when(pos_in_tile)
    def _accum_pos():
        pos_cols = row_iota + pos_off                           # (tq, 1)
        pos_ref[...] += jnp.sum(
            jnp.where(col_ids == pos_cols, sim, 0.0), axis=1, keepdims=True)

    # ---- denominator accumulation.
    diag_off = row0 - col0
    diag_in_tile = jnp.logical_and(diag_off < tk, diag_off + tq > 0)
    diag_cols = row_iota + diag_off

    if not use_online_max:
        # Unit-norm rows => sim <= 1, so exp((sim - 1)/T) <= 1: fixed-max
        # logsumexp -- no per-step lane max (XLU) or exp rescale.
        p = jnp.exp((sim - 1.0) * inv_temp)

        @pl.when(diag_in_tile)
        def _acc_masked():
            l_ref[...] += jnp.sum(
                jnp.where(col_ids == diag_cols, 0.0, p), axis=1, keepdims=True)

        @pl.when(jnp.logical_not(diag_in_tile))
        def _acc():
            l_ref[...] += jnp.sum(p, axis=1, keepdims=True)
    else:
        # Online-softmax fallback for very small temperatures (exp(-2/T) would
        # underflow f32 with the fixed shift).
        s = sim * inv_temp
        s = jnp.where(jnp.logical_and(diag_in_tile, col_ids == diag_cols),
                      jnp.float32(-1e30), s)
        m_prev = m_ref[...]
        m_new = jnp.maximum(m_prev, jnp.max(s, axis=1, keepdims=True))
        l_ref[...] = (l_ref[...] * jnp.exp(m_prev - m_new)
                      + jnp.sum(jnp.exp(s - m_new), axis=1, keepdims=True))
        m_ref[...] = m_new

    @pl.when(j == pl.num_programs(1) - 1)
    def _finalize():
        if use_online_max:
            lse = m_ref[...] + jnp.log(l_ref[...])
        else:
            lse = inv_temp + jnp.log(l_ref[...])
        out_ref[...] = lse - pos_ref[...] * inv_temp            # per-row loss (tq, 1)


def _vmem_budget_bytes():
    cap = 0
    try:
        cap = int(pltpu.get_tpu_info().vmem_capacity_bytes)
    except Exception:
        cap = 0
    if cap <= 0:
        cap = 64 * 2 ** 20        # conservative default: v7x per-TensorCore VMEM
    return int(cap * 0.7)         # leave headroom for compiler temporaries


def _estimate_vmem_bytes(tq, tk, dp):
    q = 2 * tq * dp * 2           # double-buffered bf16 Q row block
    k = 2 * tk * dp * 2           # double-buffered bf16 K column block
    sim = 2 * tq * tk * 4         # f32 sim tile + exp intermediate
    scr = 3 * tq * 4 + 2 * tq * 4  # per-row accumulators + output block
    return q + k + sim + scr


def _pick_tiles(b, n, dp, budget):
    # Prefer the largest Q tile (K HBM traffic ~ (n/tq)*n*dp), then the largest
    # K tile, that still fit the VMEM budget.  tq divides b so a row block
    # never straddles the two halves; n_row_blocks is therefore always even
    # (>= 2) and the "parallel" row axis can split across TensorCores.
    tq_cands = [c for c in (1024, 512, 256, 128, 64, 32, 16, 8) if b % c == 0] or [b]
    tk_cands = [c for c in (512, 256, 128, 64, 32, 16, 8) if n % c == 0] or [n]
    for tq in tq_cands:
        for tk in tk_cands:
            if _estimate_vmem_bytes(tq, tk, dp) <= budget:
                return tq, tk
    return tq_cands[-1], tk_cands[-1]


def infonce_loss(original, augmented, temperature=0.07):
    assert original.shape == augmented.shape and original.ndim == 2
    b, d = original.shape
    assert b % 8 == 0, "batch size must be a multiple of 8 (TPU sublane tiling)"
    n = 2 * b

    # Normalize once in f32 in the wrapper (one cheap O(n*d) XLA op), zero-pad
    # features to 128 lanes (zeros change neither norms nor dot products) and
    # cast to bf16 so the streamed K blocks carry half the HBM bytes.
    e = jnp.concatenate([original, augmented], axis=0).astype(jnp.float32)
    e = _l2_normalize_rows(e)
    dp = ((d + 127) // 128) * 128
    if dp != d:
        e = jnp.pad(e, ((0, 0), (0, dp - d)))
    e = e.astype(jnp.bfloat16)

    budget = _vmem_budget_bytes()
    tq, tk = _pick_tiles(b, n, dp, budget)
    n_row_blocks = n // tq
    n_col_blocks = n // tk

    # Fixed-max softmax is valid while exp(-2/T) stays a normal f32.
    use_online_max = float(temperature) < 0.024
    kernel = functools.partial(
        _infonce_kernel,
        inv_temp=float(1.0 / temperature),
        half_n=b,
        use_online_max=use_online_max)

    cost = pl.CostEstimate(
        flops=2 * n * n * dp,
        transcendentals=n * n,
        bytes_accessed=n_row_blocks * n * dp * 2 + n * dp * 2 + n * 4)

    vmem_limit = int(min(max(budget, 32 * 2 ** 20), 127 * 2 ** 20))

    row_loss = pl.pallas_call(
        kernel,
        out_shape=jax.ShapeDtypeStruct((n, 1), jnp.float32),
        grid_spec=pltpu.PrefetchScalarGridSpec(
            num_scalar_prefetch=0,
            grid=(n_row_blocks, n_col_blocks),
            in_specs=[
                # Q row block: varies with i only -> fetched once per row block.
                pl.BlockSpec((tq, dp), lambda i, j: (i, 0)),
                # K column block, streamed over j (the dominant HBM stream).
                # TODO(synk): sweep pipeline_mode=pl.Buffered(3) for small dp
                # if profiling shows exposed DMA latency (not BW saturation).
                pl.BlockSpec((tk, dp), lambda i, j: (j, 0)),
            ],
            out_specs=pl.BlockSpec((tq, 1), lambda i, j: (i, 0)),
            scratch_shapes=[
                pltpu.VMEM((tq, 1), jnp.float32),   # positive (label) logits
                pltpu.VMEM((tq, 1), jnp.float32),   # running sum-exp
                pltpu.VMEM((tq, 1), jnp.float32),   # running max (fallback only)
            ],
        ),
        compiler_params=pltpu.CompilerParams(
            dimension_semantics=("parallel", "arbitrary"),
            vmem_limit_bytes=vmem_limit),
        cost_estimate=cost,
    )(e, e)

    # TODO(synk): final mean over 2B per-row losses is a tiny XLA reduce in the
    # wrapper (kept outside the kernel so the row-block grid axis can stay
    # "parallel" across TensorCores without a shared scalar accumulator).
    return jnp.mean(row_loss)


def _reference_loss(original, augmented, temperature=0.07):
    # Pure-JAX (f32) reference matching the PyTorch module.
    def norm(x):
        return x / jnp.maximum(jnp.linalg.norm(x, axis=1, keepdims=True), 1e-12)

    b = original.shape[0]
    e = jnp.concatenate([norm(original), norm(augmented)], axis=0)
    sim = e @ e.T
    n = 2 * b
    sim = jnp.where(jnp.eye(n, dtype=bool), -jnp.inf, sim) / temperature
    labels = jnp.concatenate([jnp.arange(b) + b, jnp.arange(b)])
    lse = jax.scipy.special.logsumexp(sim, axis=1)
    return jnp.mean(lse - sim[jnp.arange(n), labels])


if __name__ == "__main__":
    key = jax.random.PRNGKey(0)
    k1, k2 = jax.random.split(key)
    B, D = 8, 32  # small synthetic shapes: batch=8 embeddings of dim 32
    original = jax.random.normal(k1, (B, D), dtype=jnp.float32)
    augmented = jax.random.normal(k2, (B, D), dtype=jnp.float32)

    loss = infonce_loss(original, augmented, temperature=0.07)
    jax.block_until_ready(loss)

    ref = _reference_loss(original, augmented, temperature=0.07)
    # bf16 MXU operands (f32 accumulate) -> slightly looser tolerance than f32.
    assert jnp.allclose(loss, ref, atol=5e-2, rtol=5e-2), (loss, ref)

    print("KERNEL_OK")
</pallas_src>

<mosaic_0001>
module attributes {stable_mosaic.version = 11 : i64} {
  func.func @_infonce_kernel(%arg0: i32, %arg1: i32, %arg2: memref<8x128xbf16, #tpu.memory_space<vmem>>, %arg3: memref<16x128xbf16, #tpu.memory_space<vmem>>, %arg4: memref<8x1xf32, #tpu.memory_space<vmem>>, %arg5: memref<8x1xf32, #tpu.memory_space<vmem>>, %arg6: memref<8x1xf32, #tpu.memory_space<vmem>>, %arg7: memref<8x1xf32, #tpu.memory_space<vmem>>) attributes {dimension_semantics = [#tpu.dimension_semantics<parallel>, #tpu.dimension_semantics<arbitrary>], iteration_bounds = array<i64: 2, 1>, scalar_prefetch = 0 : i64, scratch_operands = 3 : i64, tpu.core_type = #tpu.core_type<tc>, window_params = [{transform_indices = @transform_0, window_bounds = array<i64: 8, 128>}, {transform_indices = @transform_1, window_bounds = array<i64: 16, 128>}, {transform_indices = @transform_2, window_bounds = array<i64: 8, 1>}]} {
    %c0_i32 = arith.constant 0 : i32
    %0 = arith.cmpi eq, %arg1, %c0_i32 : i32
    %1 = arith.extui %0 : i1 to i32
    %c0_i32_0 = arith.constant 0 : i32
    %2 = arith.cmpi ne, %1, %c0_i32_0 : i32
    scf.if %2 {
      %cst_19 = arith.constant 0.000000e+00 : f32
      %40 = vector.broadcast %cst_19 : f32 to vector<8x1xf32>
      %c0_20 = arith.constant 0 : index
      %c0_21 = arith.constant 0 : index
      %41 = vector.load %arg5[%c0_20, %c0_21] : memref<8x1xf32, #tpu.memory_space<vmem>>, vector<8x1xf32>
      tpu.vector_store %arg5[%c0_20, %c0_21], %40 {strides = array<i32>} : memref<8x1xf32, #tpu.memory_space<vmem>>, vector<8x1xf32>,
      %cst_22 = arith.constant 0.000000e+00 : f32
      %42 = vector.broadcast %cst_22 : f32 to vector<8x1xf32>
      %c0_23 = arith.constant 0 : index
      %c0_24 = arith.constant 0 : index
      %43 = vector.load %arg6[%c0_23, %c0_24] : memref<8x1xf32, #tpu.memory_space<vmem>>, vector<8x1xf32>
      tpu.vector_store %arg6[%c0_23, %c0_24], %42 {strides = array<i32>} : memref<8x1xf32, #tpu.memory_space<vmem>>, vector<8x1xf32>,
    } else {
    }
    %c0 = arith.constant 0 : index
    %c0_1 = arith.constant 0 : index
    %3 = vector.load %arg2[%c0, %c0_1] : memref<8x128xbf16, #tpu.memory_space<vmem>>, vector<8x128xbf16>
    %c0_2 = arith.constant 0 : index
    %c0_3 = arith.constant 0 : index
    %4 = vector.load %arg3[%c0_2, %c0_3] : memref<16x128xbf16, #tpu.memory_space<vmem>>, vector<16x128xbf16>
    %cst = arith.constant dense<0.000000e+00> : vector<8x16xf32>
    %5 = tpu.matmul %3, %4, %cst {dimension_numbers = #tpu.dot_dimension_numbers<[1], [1], [0], [0], [0, 0, 1, 0], [], []>} : vector<8x128xbf16>, vector<16x128xbf16>, vector<8x16xf32> -> vector<8x16xf32>
    %c8_i32 = arith.constant 8 : i32
    %6 = arith.muli %arg0, %c8_i32 : i32
    %c16_i32 = arith.constant 16 : i32
    %7 = arith.muli %arg1, %c16_i32 : i32
    %8 = tpu.iota {dimensions = array<i32: 1>} : vector<8x16xi32>
    %9 = tpu.iota {dimensions = array<i32: 0>} : vector<8x1xi32>
    %c8_i32_4 = arith.constant 8 : i32
    %10 = arith.cmpi slt, %6, %c8_i32_4 : i32
    %c8_i32_5 = arith.constant 8 : i32
    %c-8_i32 = arith.constant -8 : i32
    %11 = arith.select %10, %c8_i32_5, %c-8_i32 : i32
    %12 = arith.addi %6, %11 : i32
    %13 = arith.subi %12, %7 : i32
    %c16_i32_6 = arith.constant 16 : i32
    %14 = arith.cmpi slt, %13, %c16_i32_6 : i32
    %c8_i32_7 = arith.constant 8 : i32
    %15 = arith.addi %13, %c8_i32_7 : i32
    %c0_i32_8 = arith.constant 0 : i32
    %16 = arith.cmpi sgt, %15, %c0_i32_8 : i32
    %17 = arith.andi %14, %16 : i1
    %18 = arith.extui %17 : i1 to i32
    %c0_i32_9 = arith.constant 0 : i32
    %19 = arith.cmpi ne, %18, %c0_i32_9 : i32
    scf.if %19 {
      %40 = vector.broadcast %13 : i32 to vector<8x1xi32>
      %41 = arith.addi %9, %40 : vector<8x1xi32>
      %c0_19 = arith.constant 0 : index
      %c0_20 = arith.constant 0 : index
      %42 = vector.load %arg5[%c0_19, %c0_20] : memref<8x1xf32, #tpu.memory_space<vmem>>, vector<8x1xf32>
      %43 = vector.broadcast %41 : vector<8x1xi32> to vector<8x16xi32>
      %44 = arith.cmpi eq, %8, %43 : vector<8x16xi32>
      %cst_21 = arith.constant 0.000000e+00 : f32
      %45 = vector.broadcast %cst_21 : f32 to vector<8x16xf32>
      %46 = arith.select %44, %5, %45 : vector<8x16xi1>, vector<8x16xf32>
      %cst_22 = arith.constant dense<0.000000e+00> : vector<8xf32>
      %47 = vector.multi_reduction <add>, %46, %cst_22 [1] : vector<8x16xf32> to vector<8xf32>
      %48 = vector.shape_cast %47 : vector<8xf32> to vector<8x1xf32>
      %49 = arith.addf %42, %48 : vector<8x1xf32>
      %c0_23 = arith.constant 0 : index
      %c0_24 = arith.constant 0 : index
      %50 = vector.load %arg5[%c0_23, %c0_24] : memref<8x1xf32, #tpu.memory_space<vmem>>, vector<8x1xf32>
      tpu.vector_store %arg5[%c0_23, %c0_24], %49 {strides = array<i32>} : memref<8x1xf32, #tpu.memory_space<vmem>>, vector<8x1xf32>,
    } else {
    }
    %20 = arith.subi %6, %7 : i32
    %c16_i32_10 = arith.constant 16 : i32
    %21 = arith.cmpi slt, %20, %c16_i32_10 : i32
    %c8_i32_11 = arith.constant 8 : i32
    %22 = arith.addi %20, %c8_i32_11 : i32
    %c0_i32_12 = arith.constant 0 : i32
    %23 = arith.cmpi sgt, %22, %c0_i32_12 : i32
    %24 = arith.andi %21, %23 : i1
    %25 = vector.broadcast %20 : i32 to vector<8x1xi32>
    %26 = arith.addi %9, %25 : vector<8x1xi32>
    %cst_13 = arith.constant 1.000000e+00 : f32
    %27 = vector.broadcast %cst_13 : f32 to vector<8x16xf32>
    %28 = arith.subf %5, %27 : vector<8x16xf32>
    %cst_14 = arith.constant 14.2857141 : f32
    %29 = vector.broadcast %cst_14 : f32 to vector<8x16xf32>
    %30 = arith.mulf %28, %29 : vector<8x16xf32>
    %31 = math.exp %30 : vector<8x16xf32>
    %32 = arith.extui %24 : i1 to i32
    %c0_i32_15 = arith.constant 0 : i32
    %33 = arith.cmpi ne, %32, %c0_i32_15 : i32
    scf.if %33 {
      %c0_19 = arith.constant 0 : index
      %c0_20 = arith.constant 0 : index
      %40 = vector.load %arg6[%c0_19, %c0_20] : memref<8x1xf32, #tpu.memory_space<vmem>>, vector<8x1xf32>
      %41 = vector.broadcast %26 : vector<8x1xi32> to vector<8x16xi32>
      %42 = arith.cmpi eq, %8, %41 : vector<8x16xi32>
      %cst_21 = arith.constant 0.000000e+00 : f32
      %43 = vector.broadcast %cst_21 : f32 to vector<8x16xf32>
      %44 = arith.select %42, %43, %31 : vector<8x16xi1>, vector<8x16xf32>
      %cst_22 = arith.constant dense<0.000000e+00> : vector<8xf32>
      %45 = vector.multi_reduction <add>, %44, %cst_22 [1] : vector<8x16xf32> to vector<8xf32>
      %46 = vector.shape_cast %45 : vector<8xf32> to vector<8x1xf32>
      %47 = arith.addf %40, %46 : vector<8x1xf32>
      %c0_23 = arith.constant 0 : index
      %c0_24 = arith.constant 0 : index
      %48 = vector.load %arg6[%c0_23, %c0_24] : memref<8x1xf32, #tpu.memory_space<vmem>>, vector<8x1xf32>
      tpu.vector_store %arg6[%c0_23, %c0_24], %47 {strides = array<i32>} : memref<8x1xf32, #tpu.memory_space<vmem>>, vector<8x1xf32>,
    } else {
    }
    %true = arith.constant true
    %34 = arith.xori %24, %true : i1
    %35 = arith.extui %34 : i1 to i32
    %c0_i32_16 = arith.constant 0 : i32
    %36 = arith.cmpi ne, %35, %c0_i32_16 : i32
    scf.if %36 {
      %c0_19 = arith.constant 0 : index
      %c0_20 = arith.constant 0 : index
      %40 = vector.load %arg6[%c0_19, %c0_20] : memref<8x1xf32, #tpu.memory_space<vmem>>, vector<8x1xf32>
      %cst_21 = arith.constant dense<0.000000e+00> : vector<8xf32>
      %41 = vector.multi_reduction <add>, %31, %cst_21 [1] : vector<8x16xf32> to vector<8xf32>
      %42 = vector.shape_cast %41 : vector<8xf32> to vector<8x1xf32>
      %43 = arith.addf %40, %42 : vector<8x1xf32>
      %c0_22 = arith.constant 0 : index
      %c0_23 = arith.constant 0 : index
      %44 = vector.load %arg6[%c0_22, %c0_23] : memref<8x1xf32, #tpu.memory_space<vmem>>, vector<8x1xf32>
      tpu.vector_store %arg6[%c0_22, %c0_23], %43 {strides = array<i32>} : memref<8x1xf32, #tpu.memory_space<vmem>>, vector<8x1xf32>,
    } else {
    }
    %c0_i32_17 = arith.constant 0 : i32
    %37 = arith.cmpi eq, %arg1, %c0_i32_17 : i32
    %38 = arith.extui %37 : i1 to i32
    %c0_i32_18 = arith.constant 0 : i32
    %39 = arith.cmpi ne, %38, %c0_i32_18 : i32
    scf.if %39 {
      %c0_19 = arith.constant 0 : index
      %c0_20 = arith.constant 0 : index
      %40 = vector.load %arg6[%c0_19, %c0_20] : memref<8x1xf32, #tpu.memory_space<vmem>>, vector<8x1xf32>
      %41 = math.log %40 : vector<8x1xf32>
      %cst_21 = arith.constant 14.2857141 : f32
      %42 = vector.broadcast %cst_21 : f32 to vector<8x1xf32>
      %43 = arith.addf %42, %41 : vector<8x1xf32>
      %c0_22 = arith.constant 0 : index
      %c0_23 = arith.constant 0 : index
      %44 = vector.load %arg5[%c0_22, %c0_23] : memref<8x1xf32, #tpu.memory_space<vmem>>, vector<8x1xf32>
      %cst_24 = arith.constant 14.2857141 : f32
      %45 = vector.broadcast %cst_24 : f32 to vector<8x1xf32>
      %46 = arith.mulf %44, %45 : vector<8x1xf32>
      %47 = arith.subf %43, %46 : vector<8x1xf32>
      %c0_25 = arith.constant 0 : index
      %c0_26 = arith.constant 0 : index
      %48 = vector.load %arg4[%c0_25, %c0_26] : memref<8x1xf32, #tpu.memory_space<vmem>>, vector<8x1xf32>
      tpu.vector_store %arg4[%c0_25, %c0_26], %47 {strides = array<i32>} : memref<8x1xf32, #tpu.memory_space<vmem>>, vector<8x1xf32>,
    } else {
    }
    return
  }
  func.func @transform_0(%arg0: i32, %arg1: i32) -> (i32, i32) {
    %c0_i32 = arith.constant 0 : i32
    %c0_i32_0 = arith.constant 0 : i32
    return %arg0, %c0_i32 : i32, i32
  }
  func.func @transform_1(%arg0: i32, %arg1: i32) -> (i32, i32) {
    %c0_i32 = arith.constant 0 : i32
    %c0_i32_0 = arith.constant 0 : i32
    return %arg1, %c0_i32 : i32, i32
  }
  func.func @transform_2(%arg0: i32, %arg1: i32) -> (i32, i32) {
    %c0_i32 = arith.constant 0 : i32
    %c0_i32_0 = arith.constant 0 : i32
    return %arg0, %c0_i32 : i32, i32
  }
}

</mosaic_0001>

<llo_original>
// kernel: tpu_custom_call.1
$region0: #{tpu_custom_call.1}
  #allocation0 [shape = 'u32[]', space=smem, size = 0x4, offset = 0x4, fixed_abs, tag = 'smem constant byte address 0x4 - core index']
  #allocation1 [shape = 'u32[144,128]{1,0:T(1,128)}', space=vmem, size = 0x12000, scoped, tag = 'internal scratch']
  #allocation2 [shape = 'f32[8,1]{1,0:T(8,128)}', space=vmem, size = 0x1000, scoped, tag = 'scratch operand']
  #allocation3 [shape = 'f32[8,1]{1,0:T(8,128)}', space=vmem, size = 0x1000, scoped, tag = 'scratch operand']
  #allocation4 [shape = 'f32[8,1]{1,0:T(8,128)}', space=vmem, size = 0x1000, scoped, tag = 'scratch operand']
  %s0 = inlined_call_operand.hbm [shape: bf16[16,128], index: 0, kind: input, shape index: {}]
  %s1 = inlined_call_operand.hbm [shape: bf16[16,128], index: 1, kind: input, shape index: {}]
  %s2 = inlined_call_operand.vmem [shape: f32[16,1], index: 2, kind: output, shape index: {}]
  %s3 = sld [smem:[#allocation0]]
  $region69: #{tpu_custom_call.1} parent=0
    _
  %s5 = ssub.s32 1, %s3
  %s6 = scalar_select 0, %s5, %s3
  $region1: #{tpu_custom_call.1} parent=0
    #allocation5 [shape = 'u8[4096]{0}', space=vmem, size = 0x1000, scoped, tag = 'input window, operand 0']
    #allocation6 [shape = 's32[2]{0}', space=sflag, size = 0x8, scoped, tag = 'scoped memory for tpu_custom_call.1']
    #allocation7 [shape = 'u8[4096]{0}', space=vmem, size = 0x1000, scoped, tag = 'input window, operand 1, single buffered']
    #allocation8 [shape = 's32[1]{0}', space=sflag, size = 0x4, scoped, tag = 'scoped memory for tpu_custom_call.1']
    %7 = vsyncpa [#allocation6], 0
    %s8 = scalar_lea.sflag [#allocation6], 1
    %9 = vsyncpa %s8, 0
    %10 = vsyncpa [#allocation8], 0
    loop: start=0, step=1, limit=4
    $region2: #{tpu_custom_call.1} parent=1 // loop_pre_header
      _
    $region3: #{tpu_custom_call.1} parent=1 // loop_header
      %s12 = sphi 0, %s16
      %p13 = scmp.ge.s32.totalorder %s12, 4
      %s19 = sphi 0, %s31
      %s20 = sphi 0, %s27
      %s21 = sphi 0, %s19
      %s22 = sphi 0, %s20
      %s23 = sphi 0, %s21
      %s24 = sphi 0, %s22
      %s34 = sphi 0, %s36
      %s37 = sphi 0, %s34
      %s38 = sphi 0, %s37
      %s54 = sphi 0, %s38
      %s60 = sphi 0, %s62
      %s63 = sphi 0, %s60
      %s64 = sphi 0, %s63
      %s80 = sphi 0, %s64
      %s86 = sphi 0, %s88
      %s89 = sphi 0, %s86
      %s90 = sphi 0, %s89
      %s106 = sphi 0, %s90
    $region4: #{tpu_custom_call.1} parent=1 // loop_header_branch
      %15 = sbr.rel (%p13) target = $region8
    $region5: #{tpu_custom_call.1} parent=1 // loop_body
      %s17 = ssub.s32 %s12, 1
      %s18 = ssub.s32 %s12, 2
      %s25 = sadd.s32 1, %s20
      %p26 = scmp.ge.s32.totalorder %s25, 1
      %s27 = scalar_select %p26, 0, %s25
      %s28 = sadd.s32 1, %s19
      %s29 = scalar_select %p26, %s28, %s19
      %p30 = scmp.ge.s32.totalorder %s29, 2
      %s31 = scalar_select %p30, 0, %s29
      %s32 = ssub.s32 %s19, %s31
      %p33 = scmp.eq.s32.totalorder %s32, 0
      %s35 = sadd.s32 %s34, 1
      %s36 = scalar_select %p33, %s34, %s35
      %p39 = pneg %p33
      %p40 = scmp.eq.s32.totalorder %s12, 1
      %p41 = por %p39, %p40
      %p42 = scmp.ne.s32.totalorder %s34, %s37
      %p43 = scmp.eq.s32.totalorder %s12, 0
      %p44 = por %p42, %p43
      %p45 = scmp.ne.s32.totalorder %s34, %s37
      %p46 = scmp.eq.s32.totalorder %s17, 1
      %p47 = por %p45, %p46
      %p48 = scmp.ne.s32.totalorder %s37, %s38
      %p49 = scmp.eq.s32.totalorder %s17, 0
      %p50 = por %p48, %p49
      %p51 = scmp.ne.s32.totalorder %s37, %s38
      %p52 = scmp.eq.s32.totalorder %s18, 1
      %p53 = por %p51, %p52
      %p55 = scmp.ne.s32.totalorder %s38, %s54
      %p56 = scmp.eq.s32.totalorder %s18, 0
      %p57 = por %p55, %p56
      %s58 = ssub.s32 %s20, %s27
      %p59 = scmp.eq.s32.totalorder %s58, 0
      %s61 = sadd.s32 %s60, 1
      %s62 = scalar_select %p59, %s60, %s61
      %p65 = pneg %p59
      %p66 = scmp.eq.s32.totalorder %s12, 1
      %p67 = por %p65, %p66
      %p68 = scmp.ne.s32.totalorder %s60, %s63
      %p69 = scmp.eq.s32.totalorder %s12, 0
      %p70 = por %p68, %p69
      %p71 = scmp.ne.s32.totalorder %s60, %s63
      %p72 = scmp.eq.s32.totalorder %s17, 1
      %p73 = por %p71, %p72
      %p74 = scmp.ne.s32.totalorder %s63, %s64
      %p75 = scmp.eq.s32.totalorder %s17, 0
      %p76 = por %p74, %p75
      %p77 = scmp.ne.s32.totalorder %s63, %s64
      %p78 = scmp.eq.s32.totalorder %s18, 1
      %p79 = por %p77, %p78
      %p81 = scmp.ne.s32.totalorder %s64, %s80
      %p82 = scmp.eq.s32.totalorder %s18, 0
      %p83 = por %p81, %p82
      %s84 = ssub.s32 %s19, %s31
      %p85 = scmp.eq.s32.totalorder %s84, 0
      %s87 = sadd.s32 %s86, 1
      %s88 = scalar_select %p85, %s86, %s87
      %p91 = pneg %p85
      %p92 = scmp.eq.s32.totalorder %s12, 1
      %p93 = por %p91, %p92
      %p94 = scmp.ne.s32.totalorder %s86, %s89
      %p95 = scmp.eq.s32.totalorder %s12, 0
      %p96 = por %p94, %p95
      %p97 = scmp.ne.s32.totalorder %s86, %s89
      %p98 = scmp.eq.s32.totalorder %s17, 1
      %p99 = por %p97, %p98
      %p100 = scmp.ne.s32.totalorder %s89, %s90
      %p101 = scmp.eq.s32.totalorder %s17, 0
      %p102 = por %p100, %p101
      %p103 = scmp.ne.s32.totalorder %s89, %s90
      %p104 = scmp.eq.s32.totalorder %s18, 1
      %p105 = por %p103, %p104
      %p107 = scmp.ne.s32.totalorder %s90, %s106
      %p108 = scmp.eq.s32.totalorder %s18, 0
      %p109 = por %p107, %p108
      %p110 = scmp.le.s32.totalorder 1, %s12
      %p111 = scmp.lt.s32.totalorder %s12, 3
      %p112 = pnand %p110, %p111
      %p113 = pneg %p112
      // Predicated region
      $region9: #{tpu_custom_call.1} parent=5 // pred_check
        _
      $region10: #{tpu_custom_call.1} parent=5 // pred_check_branch
        %115 = sbr.rel (%p112) target = $region12
      $region11: #{tpu_custom_call.1} parent=5 // pred_region
        %s116 = ssub.s32 %s12, 1
        // Predicated region
        $region13: #{tpu_custom_call.1} parent=11 // pred_check
          %p117 = pneg %p76
        $region14: #{tpu_custom_call.1} parent=11 // pred_check_branch
          %119 = sbr.rel (%p117) target = $region16
        $region15: #{tpu_custom_call.1} parent=11 // pred_region
          %s120 = smul.u32 2, %s22
          %s122 = ssub.s32 128, 128
          %123 = vsyncadd [#allocation8], %s122
          %s124 = smul.addr %s120, 64
          %s125 = scalar_lea.hbm %s1, %s124
          %s126 = sshll.u32 [#allocation7], 4
          %s127 = int_to_ptr.vmem [resolvable:$true] %s126
          %132 = dma.hbm_to_vmem [thread:$0]  %s125, 128, %s127, [#allocation8], 64, 64, 4
        $region16: #{tpu_custom_call.1} parent=11 // pred_fallthru
          _
      $region12: #{tpu_custom_call.1} parent=5 // pred_fallthru
        _
      %p133 = scmp.lt.s32.totalorder %s12, 2
      // Predicated region
      $region17: #{tpu_custom_call.1} parent=5 // pred_check
        %p134 = pneg %p133
      $region18: #{tpu_custom_call.1} parent=5 // pred_check_branch
        %136 = sbr.rel (%p134) target = $region20
      $region19: #{tpu_custom_call.1} parent=5 // pred_region
        // Predicated region
        $region21: #{tpu_custom_call.1} parent=19 // pred_check
          %p137 = pneg %p44
        $region22: #{tpu_custom_call.1} parent=19 // pred_check_branch
          %139 = sbr.rel (%p137) target = $region24
        $region23: #{tpu_custom_call.1} parent=19 // pred_region
          %s140 = sand.u32 %s34, 1
          %s141 = scalar_lea.sflag [#allocation6], %s140
          %s142 = sand.u32 %s34, 1
          %s143 = smul.addr %s142, 4
          %s144 = scalar_lea.vmem [#allocation5], %s143
          %s146 = ssub.s32 64, 64
          %147 = vsyncadd %s141, %s146
          %s148 = smul.addr %s19, 64
          %s149 = scalar_lea.hbm %s0, %s148
          %s151 = sshll.u32 %s144, 4
          %s152 = int_to_ptr.vmem [resolvable:$true] %s151
          %154 = dma.hbm_to_vmem [thread:$0]  %s149, 64, %s152, %s141
        $region24: #{tpu_custom_call.1} parent=19 // pred_fallthru
          _
      $region20: #{tpu_custom_call.1} parent=5 // pred_fallthru
        _
      %p155 = scmp.le.s32.totalorder 1, %s12
      %p156 = scmp.lt.s32.totalorder %s12, 3
      %p157 = pnand %p155, %p156
      %p158 = pneg %p157
      // Predicated region
      $region25: #{tpu_custom_call.1} parent=5 // pred_check
        _
      $region26: #{tpu_custom_call.1} parent=5 // pred_check_branch
        %160 = sbr.rel (%p157) target = $region28
      $region27: #{tpu_custom_call.1} parent=5 // pred_region
        %s161 = ssub.s32 %s12, 1
        %s162 = sand.u32 %s37, 1
        %s163 = scalar_lea.sflag [#allocation6], %s162
        %s164 = sand.u32 %s37, 1
        %s165 = smul.addr %s164, 4
        %s166 = scalar_lea.vmem [#allocation5], %s165
        // Predicated region
        $region29: #{tpu_custom_call.1} parent=27 // pred_check
          %p167 = pneg %p50
        $region30: #{tpu_custom_call.1} parent=27 // pred_check_branch
          %169 = sbr.rel (%p167) target = $region32
        $region31: #{tpu_custom_call.1} parent=27 // pred_region
          %170 = dma.done %s163, 64
        $region32: #{tpu_custom_call.1} parent=27 // pred_fallthru
          _
        // Predicated region
        $region33: #{tpu_custom_call.1} parent=27 // pred_check
          %p171 = pneg %p76
        $region34: #{tpu_custom_call.1} parent=27 // pred_check_branch
          %173 = sbr.rel (%p171) target = $region36
        $region35: #{tpu_custom_call.1} parent=27 // pred_region
          %174 = dma.done [#allocation8], 128
        $region36: #{tpu_custom_call.1} parent=27 // pred_fallthru
          _
        %s175 = sand.u32 %s37, 1
        %s176 = scalar_lea.sflag [#allocation6], %s175
        %s177 = sand.u32 %s37, 1
        %s178 = smul.addr %s177, 4
        %s179 = scalar_lea.vmem [#allocation5], %s178
        %p180 = pneg %p50
        %p181 = pneg %p47
        %p182 = pneg %p76
        %p183 = pneg %p73
        %p184 = pneg %p102
        %p185 = pneg %p99
        %p186 = scmp.lt.s32.totalorder %s21, 1
        %s187 = scalar_select %p186, %s21, 1
        %s188 = smul.addr %s187, 8
        %s189 = scalar_lea.vmem %s2, %s188
        %s190 = smul.u32 2, %s22
        %p191 = scmp.lt.s32.totalorder %s21, 1
        %s192 = scalar_select %p191, %s21, 1
        %s193 = smul.addr %s192, 8
        %s194 = scalar_lea.vmem %s2, %s193
        %p196 = scmp.eq.s32.totalorder %s22, 0
        // Predicated region
        $region37: #{tpu_custom_call.1} parent=27 // pred_check
          %p197 = pneg %p196
        $region38: #{tpu_custom_call.1} parent=27 // pred_check_branch
          %199 = sbr.rel (%p197) target = $region40
        $region39: #{tpu_custom_call.1} parent=27 // pred_region
          %vm200 = vcmask 7168
          %201 = vst.msk [vmem:[#allocation2] sm:$0xff] %vm200, 0.0
          %202 = vst.msk [vmem:[#allocation3] sm:$0xff] %vm200, 0.0
        $region40: #{tpu_custom_call.1} parent=27 // pred_fallthru
          _
        %v203 = vld [vmem:[%s166] sm:$0xf]
        %v204 = vld [vmem:[#allocation7] sm:$0xf]
        %v205 = vld [vmem:[#allocation7 + $0x4] sm:$0xf]
        %v208 = vunpack.c.l.b16 %v204
        %v209 = vunpack.c.l.b16 %v205
        %v210 = vpack.c.b16 %v209, %v208
        %212 = vmatprep.subr.bf16.mxu0 0
        %213 = vmatpush1.bf16.xpose.msra.mxu0 0
        %214 = vmatprep.subr.bf16.mxu0 0
        %215 = vmatpush1.bf16.xpose.msra.mxu0 0
        %216 = vmatprep.subr.bf16.mxu0 0
        %217 = vmatpush1.bf16.xpose.msra.mxu0 0
        %218 = vmatprep.subr.bf16.mxu0 0
        %219 = vmatpush1.bf16.xpose.msra.mxu0 0
        %220 = vmatprep.subr.bf16.mxu0 0
        %221 = vmatpush1.bf16.xpose.msra.mxu0 0
        %222 = vmatprep.subr.bf16.mxu0 0
        %223 = vmatpush1.bf16.xpose.msra.mxu0 0
        %224 = vmatprep.subr.bf16.mxu0 0
        %225 = vmatpush1.bf16.xpose.msra.mxu0 0
        %226 = vmatprep.subr.bf16.mxu0 0
        %227 = vmatpush1.bf16.xpose.msra.mxu0 %v210
        %228 = vmatprep.subr.bf16.mxu0 0
        %229 = vmatpush2.bf16.xpose.msra.mxu0 0
        %230 = vmatprep.subr.bf16.mxu0 0
        %231 = vmatpush2.bf16.xpose.msra.mxu0 0
        %232 = vmatprep.subr.bf16.mxu0 0
        %233 = vmatpush2.bf16.xpose.msra.mxu0 0
        %234 = vmatprep.subr.bf16.mxu0 0
        %235 = vmatpush2.bf16.xpose.msra.mxu0 0
        %236 = vmatprep.subr.bf16.mxu0 0
        %237 = vmatpush2.bf16.xpose.msra.mxu0 0
        %238 = vmatprep.subr.bf16.mxu0 0
        %239 = vmatpush2.bf16.xpose.msra.mxu0 0
        %240 = vmatprep.subr.bf16.mxu0 0
        %241 = vmatpush2.bf16.xpose.msra.mxu0 0
        %242 = vmatprep.subr.bf16.mxu0 0
        %243 = vmatpush2.bf16.xpose.msra.mxu0 0
        %244 = vmatprep.mubr.bf16.mxu0 0
        %245 = vmatmul.mubr.bf16.gmra.mxu0 %v203
        %v246 = vpop.f32.mrf.mxu0
        %v247 = vadd.f32 0.0, %v246
        %v248 = vpop.f32.mrf.mxu0
        %v249 = vpop.f32.mrf.mxu0
        %v250 = vpop.f32.mrf.mxu0
        %251 = vdwg.mxu0
        %s252 = smul.u32 %s21, 8
        %s253 = smul.u32 %s22, 16
        %v254 = vlaneseq
        %v255 = vand.u32 %v254, 127
        %v256 = vlaneseq
        %v257 = vshrl.u32 %v256, 7
        %p258 = scmp.lt.s32.totalorder %s252, 8
        %s259 = scalar_select %p258, 8, 4294967288
        %s260 = sadd.s32 %s252, %s259
        %s261 = ssub.s32 %s260, %s253
        %p262 = scmp.lt.s32.totalorder %s261, 16
        %s263 = sadd.s32 %s261, 8
        %p264 = scmp.gt.s32.totalorder %s263, 0
        %p265 = pnand %p262, %p264
        %p266 = pneg %p265
        // Predicated region
        $region41: #{tpu_custom_call.1} parent=27 // pred_check
          _
        $region42: #{tpu_custom_call.1} parent=27 // pred_check_branch
          %268 = sbr.rel (%p265) target = $region44
        $region43: #{tpu_custom_call.1} parent=27 // pred_region
          %v269 = vstv %s261
          %v270 = vadd.s32 %v257, %v269
          %v271 = vld [vmem:[#allocation2] sm:$0xff]
          %vm272 = vcmp.eq.s32.totalorder %v255, %v270
          %v273 = vsel %vm272, %v247, 0.0
          %vm274 = vcmask 130048
          %v275 = vsel %vm274, %v273, 0.0
          %276 = vadd.xlane.f32.xlu0 %v275
          %v277 = vpop.xlane.xlu0 %276
          %v278 = vadd.f32 %v271, %v277
          %vm279 = vcmask 7168
          %280 = vst.msk [vmem:[#allocation2] sm:$0xff] %vm279, %v278
        $region44: #{tpu_custom_call.1} parent=27 // pred_fallthru
          _
        %s281 = ssub.s32 %s252, %s253
        %p282 = scmp.lt.s32.totalorder %s281, 16
        %s283 = sadd.s32 %s281, 8
        %p284 = scmp.gt.s32.totalorder %s283, 0
        %p285 = pnand %p282, %p284
        %p286 = pneg %p285
        %v287 = vstv %s281
        %v288 = vadd.s32 %v257, %v287
        %v289 = vsub.f32 %v247, 1.0
        %v290 = vmul.f32 %v289, 14.285714
        %v291 = vmul.f32 %v290, 1.442695
        %v292 = vpow.pop %v291
        // Predicated region
        $region45: #{tpu_custom_call.1} parent=27 // pred_check
          _
        $region46: #{tpu_custom_call.1} parent=27 // pred_check_branch
          %294 = sbr.rel (%p285) target = $region48
        $region47: #{tpu_custom_call.1} parent=27 // pred_region
          %v295 = vld [vmem:[#allocation3] sm:$0xff]
          %vm296 = vcmp.eq.s32.totalorder %v255, %v288
          %v297 = vsel %vm296, 0.0, %v292
          %vm298 = vcmask 130048
          %v299 = vsel %vm298, %v297, 0.0
          %300 = vadd.xlane.f32.xlu0 %v299
          %v301 = vpop.xlane.xlu0 %300
          %v302 = vadd.f32 %v295, %v301
          %vm303 = vcmask 7168
          %304 = vst.msk [vmem:[#allocation3] sm:$0xff] %vm303, %v302
        $region48: #{tpu_custom_call.1} parent=27 // pred_fallthru
          _
        %p305 = pneg %p286
        // Predicated region
        $region49: #{tpu_custom_call.1} parent=27 // pred_check
          _
        $region50: #{tpu_custom_call.1} parent=27 // pred_check_branch
          %307 = sbr.rel (%p286) target = $region52
        $region51: #{tpu_custom_call.1} parent=27 // pred_region
          %v308 = vld [vmem:[#allocation3] sm:$0xff]
          %vm309 = vcmask 130048
          %v310 = vsel %vm309, %v292, 0.0
          %311 = vadd.xlane.f32.xlu0 %v310
          %v312 = vpop.xlane.xlu0 %311
          %v313 = vadd.f32 %v308, %v312
          %vm314 = vcmask 7168
          %315 = vst.msk [vmem:[#allocation3] sm:$0xff] %vm314, %v313
        $region52: #{tpu_custom_call.1} parent=27 // pred_fallthru
          _
        // Predicated region
        $region53: #{tpu_custom_call.1} parent=27 // pred_check
          %p316 = pneg %p196
        $region54: #{tpu_custom_call.1} parent=27 // pred_check_branch
          %318 = sbr.rel (%p316) target = $region56
        $region55: #{tpu_custom_call.1} parent=27 // pred_region
          %v319 = vld [vmem:[#allocation3] sm:$0xff]
          %v320 = vlog2.pop %v319
          %v321 = vmul.f32 %v320, 0.6931472
          %v322 = vadd.f32 %v321, 14.285714
          %v323 = vld [vmem:[#allocation2] sm:$0xff]
          %v324 = vmul.f32 %v323, 14.285714
          %v325 = vsub.f32 %v322, %v324
          %vm326 = vcmask 7168
          %327 = vst.msk [vmem:[%s194] sm:$0xff] %vm326, %v325
        $region56: #{tpu_custom_call.1} parent=27 // pred_fallthru
          _
        %p328 = scmp.lt.s32.totalorder %s21, 1
        %s329 = scalar_select %p328, %s21, 1
        %s330 = smul.addr %s329, 8
        %s331 = scalar_lea.vmem %s2, %s330
        // Predicated region
        $region57: #{tpu_custom_call.1} parent=27 // pred_check
          %p332 = pneg %p99
        $region58: #{tpu_custom_call.1} parent=27 // pred_check_branch
          %334 = sbr.rel (%p332) target = $region60
        $region59: #{tpu_custom_call.1} parent=27 // pred_region
          _
        $region60: #{tpu_custom_call.1} parent=27 // pred_fallthru
          _
      $region28: #{tpu_custom_call.1} parent=5 // pred_fallthru
        _
      %p335 = scmp.le.s32.totalorder 2, %s12
      // Predicated region
      $region61: #{tpu_custom_call.1} parent=5 // pred_check
        %p336 = pneg %p335
      $region62: #{tpu_custom_call.1} parent=5 // pred_check_branch
        %338 = sbr.rel (%p336) target = $region64
      $region63: #{tpu_custom_call.1} parent=5 // pred_region
        %s339 = ssub.s32 %s12, 2
        // Predicated region
        $region65: #{tpu_custom_call.1} parent=63 // pred_check
          %p340 = pneg %p105
        $region66: #{tpu_custom_call.1} parent=63 // pred_check_branch
          %342 = sbr.rel (%p340) target = $region68
        $region67: #{tpu_custom_call.1} parent=63 // pred_region
          %p343 = scmp.lt.s32.totalorder %s23, 1
          %s344 = scalar_select %p343, %s23, 1
          %s345 = smul.addr %s344, 8
          %s346 = scalar_lea.vmem %s2, %s345
        $region68: #{tpu_custom_call.1} parent=63 // pred_fallthru
          _
      $region64: #{tpu_custom_call.1} parent=5 // pred_fallthru
        _
    $region6: #{tpu_custom_call.1} parent=1 // loop_footer
      %s16 = sadd.s32 1, %s12
    $region7: #{tpu_custom_call.1} parent=1 // loop_footer_branch
      %11 = sbr.rel target = $region3
    $region8: #{tpu_custom_call.1} parent=1 // loop_exit
      _
    %347 = vsyncpa [#allocation6], 1
    %s348 = scalar_lea.sflag [#allocation6], 1
    %349 = vsyncpa %s348, 1
    %350 = vsyncpa [#allocation8], 1

</llo_original>
